<compile_context>
chip_gen: v6e
topology: v6e:2x2x1
jax: 0.10.0
libtpu: 0.0.40
codegen_flags: <defaults>
</compile_context>

<pallas_src>
import math

import jax
import jax.numpy as jnp
from jax.experimental import pallas as pl
from jax.experimental.pallas import tpu as pltpu


# ---------------------------------------------------------------------------
# Kernels
# ---------------------------------------------------------------------------
def _adder_kernel_bias(x_ref, bias_ref, swb_ref, o_ref):
    # x_ref:    (TB, K)   input tile
    # bias_ref: (1, TO)   bias tile (f32)
    # swb_ref:  (1, TO)   precomputed rowsum(weight)*bias tile (f32)
    # o_ref:    (TB, TO)  output tile
    sx = jnp.sum(x_ref[...].astype(jnp.float32), axis=-1, keepdims=True)  # (TB, 1)
    out = sx * bias_ref[...] + swb_ref[...]                                # (TB, TO)
    o_ref[...] = out.astype(o_ref.dtype)


def _adder_kernel_nobias(x_ref, sw_ref, o_ref):
    # x_ref:  (TB, K)   input tile
    # sw_ref: (1, TO)   precomputed rowsum(weight) tile (f32)
    # o_ref:  (TB, TO)  output tile
    sx = jnp.sum(x_ref[...].astype(jnp.float32), axis=-1, keepdims=True)  # (TB, 1)
    o_ref[...] = (sx + sw_ref[...]).astype(o_ref.dtype)


# ---------------------------------------------------------------------------
# Wrapper
# ---------------------------------------------------------------------------
def _pick_row_tile(B, K, itemsize, max_rows=512, budget_bytes=4 * 1024 * 1024):
    """Pick a batch-tile size: full B if small, else an 8-aligned tile capped
    by a per-tile VMEM budget (safe for v7x's smaller VMEM)."""
    rows_budget = max(8, budget_bytes // max(1, K * itemsize))
    cap = min(max_rows, rows_budget)
    if B <= cap:
        return B  # full dim: always a legal block shape
    return max(8, (cap // 8) * 8)


def _pick_col_tile(O, max_cols=512):
    """Pick an out_features-tile: full O if small, else a 128-multiple tile
    (keeps output stores lane-dense)."""
    if O <= max_cols:
        return O  # full dim: always a legal block shape
    return max(128, (max_cols // 128) * 128)


def linear_adder_v1(x, weight, bias=None):
    """Pallas implementation of LinearAdderV1.forward.

    x:      (B, in_features)
    weight: (out_features, in_features)
    bias:   (out_features,) or None
    returns (B, out_features), dtype of x
    """
    B, K = x.shape
    O, Kw = weight.shape
    assert K == Kw, "in_features mismatch"

    # Hoisted parameter preprocessing (weight/bias are constants per layer):
    # rowsum(weight) in f32, and its product with bias when bias is present.
    sw = jnp.sum(weight.astype(jnp.float32), axis=-1).reshape(1, O)  # (1, O) f32

    TB = _pick_row_tile(B, K, jnp.dtype(x.dtype).itemsize)
    TO = _pick_col_tile(O)
    grid = (pl.cdiv(B, TB), pl.cdiv(O, TO))

    out_shape = jax.ShapeDtypeStruct((B, O), x.dtype)
    compiler_params = pltpu.CompilerParams(
        dimension_semantics=("parallel", "parallel"),
        vmem_limit_bytes=32 * 1024 * 1024,
    )

    x_spec = pl.BlockSpec((TB, K), lambda i, j: (i, 0))
    vec_spec = pl.BlockSpec((1, TO), lambda i, j: (0, j))
    out_spec = pl.BlockSpec((TB, TO), lambda i, j: (i, j))

    if bias is not None:
        bias_f32 = bias.astype(jnp.float32).reshape(1, O)
        swb = sw * bias_f32  # (1, O) f32, precomputed rowsum(weight)*bias
        return pl.pallas_call(
            _adder_kernel_bias,
            out_shape=out_shape,
            grid_spec=pltpu.PrefetchScalarGridSpec(
                num_scalar_prefetch=0,
                grid=grid,
                in_specs=[x_spec, vec_spec, vec_spec],
                out_specs=out_spec,
            ),
            compiler_params=compiler_params,
        )(x, bias_f32, swb)
    else:
        # Separate variant: no ones-array, no pointless multiply.
        return pl.pallas_call(
            _adder_kernel_nobias,
            out_shape=out_shape,
            grid_spec=pltpu.PrefetchScalarGridSpec(
                num_scalar_prefetch=0,
                grid=grid,
                in_specs=[x_spec, vec_spec],
                out_specs=out_spec,
            ),
            compiler_params=compiler_params,
        )(x, sw)


# ---------------------------------------------------------------------------
# Parameter init matching LinearAdderV1.reset_parameters
# ---------------------------------------------------------------------------
def init_params(key, in_features, out_features, dtype=jnp.float32):
    """kaiming_uniform_(a=sqrt(5)) on a (out, in) weight gives
       bound_w = sqrt(6 / ((1 + a^2) * fan_in)) = 1 / sqrt(fan_in);
       bias bound = 1 / sqrt(fan_in)."""
    k_w, k_b = jax.random.split(key)
    bound = 1.0 / math.sqrt(in_features)
    weight = jax.random.uniform(
        k_w, (out_features, in_features), dtype=dtype, minval=-bound, maxval=bound
    )
    bias = jax.random.uniform(
        k_b, (out_features,), dtype=dtype, minval=-bound, maxval=bound
    )
    return weight, bias


if __name__ == "__main__":
    key = jax.random.PRNGKey(0)
    k_x, k_p = jax.random.split(key)

    B, in_features, out_features = 8, 32, 16
    x = jax.random.normal(k_x, (B, in_features), dtype=jnp.float32)
    weight, bias = init_params(k_p, in_features, out_features)

    # With-bias path
    out = jax.block_until_ready(linear_adder_v1(x, weight, bias))
    ref = jnp.sum(x[:, None, :] + weight[None, :, :], axis=-1) * bias[None, :]
    assert out.shape == (B, out_features)
    assert jnp.allclose(out, ref, atol=1e-4, rtol=1e-4)

    # bias=None path (dedicated kernel variant, no dummy multiply)
    out_nb = jax.block_until_ready(linear_adder_v1(x, weight, None))
    ref_nb = jnp.sum(x[:, None, :] + weight[None, :, :], axis=-1)
    assert jnp.allclose(out_nb, ref_nb, atol=1e-4, rtol=1e-4)

    print("KERNEL_OK")
</pallas_src>

<mosaic_0001>
module attributes {stable_mosaic.version = 11 : i64} {
  func.func @_adder_kernel_bias(%arg0: i32, %arg1: i32, %arg2: memref<8x32xf32, #tpu.memory_space<vmem>>, %arg3: memref<1x16xf32, #tpu.memory_space<vmem>>, %arg4: memref<1x16xf32, #tpu.memory_space<vmem>>, %arg5: memref<8x16xf32, #tpu.memory_space<vmem>>) attributes {dimension_semantics = [#tpu.dimension_semantics<parallel>, #tpu.dimension_semantics<parallel>], iteration_bounds = array<i64: 1, 1>, scalar_prefetch = 0 : i64, scratch_operands = 0 : i64, tpu.core_type = #tpu.core_type<tc>, window_params = [{transform_indices = @transform_0, window_bounds = array<i64: 8, 32>}, {transform_indices = @transform_1, window_bounds = array<i64: 1, 16>}, {transform_indices = @transform_2, window_bounds = array<i64: 1, 16>}, {transform_indices = @transform_3, window_bounds = array<i64: 8, 16>}]} {
    %c0 = arith.constant 0 : index
    %c0_0 = arith.constant 0 : index
    %0 = vector.load %arg2[%c0, %c0_0] : memref<8x32xf32, #tpu.memory_space<vmem>>, vector<8x32xf32>
    %cst = arith.constant dense<0.000000e+00> : vector<8xf32>
    %1 = vector.multi_reduction <add>, %0, %cst [1] : vector<8x32xf32> to vector<8xf32>
    %2 = vector.shape_cast %1 : vector<8xf32> to vector<8x1xf32>
    %c0_1 = arith.constant 0 : index
    %c0_2 = arith.constant 0 : index
    %3 = vector.load %arg3[%c0_1, %c0_2] : memref<1x16xf32, #tpu.memory_space<vmem>>, vector<1x16xf32>
    %4 = vector.broadcast %2 : vector<8x1xf32> to vector<8x16xf32>
    %5 = vector.broadcast %3 : vector<1x16xf32> to vector<8x16xf32>
    %6 = arith.mulf %4, %5 : vector<8x16xf32>
    %c0_3 = arith.constant 0 : index
    %c0_4 = arith.constant 0 : index
    %7 = vector.load %arg4[%c0_3, %c0_4] : memref<1x16xf32, #tpu.memory_space<vmem>>, vector<1x16xf32>
    %8 = vector.broadcast %7 : vector<1x16xf32> to vector<8x16xf32>
    %9 = arith.addf %6, %8 : vector<8x16xf32>
    %c0_5 = arith.constant 0 : index
    %c0_6 = arith.constant 0 : index
    %10 = vector.load %arg5[%c0_5, %c0_6] : memref<8x16xf32, #tpu.memory_space<vmem>>, vector<8x16xf32>
    tpu.vector_store %arg5[%c0_5, %c0_6], %9 {strides = array<i32>} : memref<8x16xf32, #tpu.memory_space<vmem>>, vector<8x16xf32>,
    return
  }
  func.func @transform_0(%arg0: i32, %arg1: i32) -> (i32, i32) {
    %c0_i32 = arith.constant 0 : i32
    %c0_i32_0 = arith.constant 0 : i32
    return %arg0, %c0_i32 : i32, i32
  }
  func.func @transform_1(%arg0: i32, %arg1: i32) -> (i32, i32) {
    %c0_i32 = arith.constant 0 : i32
    %c0_i32_0 = arith.constant 0 : i32
    return %c0_i32, %arg1 : i32, i32
  }
  func.func @transform_2(%arg0: i32, %arg1: i32) -> (i32, i32) {
    %c0_i32 = arith.constant 0 : i32
    %c0_i32_0 = arith.constant 0 : i32
    return %c0_i32, %arg1 : i32, i32
  }
  func.func @transform_3(%arg0: i32, %arg1: i32) -> (i32, i32) {
    %c0_i32 = arith.constant 0 : i32
    return %arg0, %arg1 : i32, i32
  }
}

</mosaic_0001>

<llo_original>
// kernel: tpu_custom_call.1
$region0: #{tpu_custom_call.1}
  #allocation0 [shape = 'u32[]', space=smem, size = 0x4, offset = 0x4, fixed_abs, tag = 'smem constant byte address 0x4 - core index']
  #allocation1 [shape = 'u32[144,128]{1,0:T(1,128)}', space=vmem, size = 0x12000, scoped, tag = 'internal scratch']
  %s0 = inlined_call_operand.hbm [shape: f32[8,32], index: 0, kind: input, shape index: {}]
  %s1 = inlined_call_operand.vmem [shape: f32[1,16], index: 1, kind: input, shape index: {}]
  %s2 = inlined_call_operand.vmem [shape: f32[1,16], index: 2, kind: input, shape index: {}]
  %s3 = inlined_call_operand.hbm [shape: f32[8,16], index: 3, kind: output, shape index: {}]
  %s4 = sld [smem:[#allocation0]]
  $region26: #{tpu_custom_call.1} parent=0
    _
  %s6 = ssub.s32 1, %s4
  %s7 = scalar_select 0, %s6, %s4
  $region1: #{tpu_custom_call.1} parent=0
    #allocation2 [shape = 'u8[4096]{0}', space=vmem, size = 0x1000, scoped, tag = 'input window, operand 0, single buffered']
    #allocation3 [shape = 's32[1]{0}', space=sflag, size = 0x4, scoped, tag = 'scoped memory for tpu_custom_call.1']
    #allocation4 [shape = 's32[1]{0}', space=sflag, size = 0x4, scoped, tag = 'scoped memory for tpu_custom_call.1']
    #allocation5 [shape = 'u8[4096]{0}', space=vmem, size = 0x1000, scoped, tag = 'output window, operand 0, single buffered']
    %8 = vsyncpa [#allocation3], 0
    %9 = vsyncpa [#allocation4], 0
    // Predicated region
    $region2: #{tpu_custom_call.1} parent=1 // pred_check
      _
    $region3: #{tpu_custom_call.1} parent=1 // pred_check_branch
      %11 = sbr.rel (0) target = $region5
    $region4: #{tpu_custom_call.1} parent=1 // pred_region
      %s13 = ssub.s32 128, 128
      %14 = vsyncadd [#allocation3], %s13
      %s16 = sshll.u32 [#allocation2], 4
      %s17 = int_to_ptr.vmem [resolvable:$true] %s16
      %19 = dma.hbm_to_vmem [thread:$0]  %s0, 128, %s17, [#allocation3]
    $region5: #{tpu_custom_call.1} parent=1 // pred_fallthru
      _
    // Predicated region
    $region6: #{tpu_custom_call.1} parent=1 // pred_check
      _
    $region7: #{tpu_custom_call.1} parent=1 // pred_check_branch
      %21 = sbr.rel (0) target = $region9
    $region8: #{tpu_custom_call.1} parent=1 // pred_region
      _
    $region9: #{tpu_custom_call.1} parent=1 // pred_fallthru
      _
    // Predicated region
    $region10: #{tpu_custom_call.1} parent=1 // pred_check
      _
    $region11: #{tpu_custom_call.1} parent=1 // pred_check_branch
      %23 = sbr.rel (0) target = $region13
    $region12: #{tpu_custom_call.1} parent=1 // pred_region
      _
    $region13: #{tpu_custom_call.1} parent=1 // pred_fallthru
      _
    // Predicated region
    $region14: #{tpu_custom_call.1} parent=1 // pred_check
      _
    $region15: #{tpu_custom_call.1} parent=1 // pred_check_branch
      %25 = sbr.rel (0) target = $region17
    $region16: #{tpu_custom_call.1} parent=1 // pred_region
      %26 = dma.done [#allocation3], 128
    $region17: #{tpu_custom_call.1} parent=1 // pred_fallthru
      _
    %v27 = vld [vmem:[#allocation2] sm:$0xff]
    %vm28 = vcmask 261120
    %v29 = vsel %vm28, %v27, 0.0
    %30 = vadd.xlane.f32.xlu0 %v29
    %v31 = vpop.xlane.xlu0 %30
    %v32 = vld [vmem:[%s1] sm:$0x1]
    %v34 = vlaneseq
    %v35 = vshrl.u32 %v34, 7
    %v36 = vsub.s32 0, %v35
    %v37 = vrot.slane %v32, %v36
    %v39 = vmul.f32 %v31, %v37
    %v40 = vld [vmem:[%s2] sm:$0x1]
    %v42 = vlaneseq
    %v43 = vshrl.u32 %v42, 7
    %v44 = vsub.s32 0, %v43
    %v45 = vrot.slane %v40, %v44
    %v47 = vadd.f32 %v39, %v45
    %vm48 = vcmask 130048
    %49 = vst.msk [vmem:[#allocation5] sm:$0xff] %vm48, %v47
    // Predicated region
    $region18: #{tpu_custom_call.1} parent=1 // pred_check
      _
    $region19: #{tpu_custom_call.1} parent=1 // pred_check_branch
      %51 = sbr.rel (0) target = $region21
    $region20: #{tpu_custom_call.1} parent=1 // pred_region
      %s53 = ssub.s32 128, 128
      %54 = vsyncadd [#allocation4], %s53
      %s56 = sshll.u32 [#allocation5], 4
      %s57 = int_to_ptr.vmem [resolvable:$true] %s56
      %59 = dma.vmem_to_hbm [thread:$0]  %s57, 128, %s3, [#allocation4]
    $region21: #{tpu_custom_call.1} parent=1 // pred_fallthru
      _
    // Predicated region
    $region22: #{tpu_custom_call.1} parent=1 // pred_check
      _
    $region23: #{tpu_custom_call.1} parent=1 // pred_check_branch
      %61 = sbr.rel (0) target = $region25
    $region24: #{tpu_custom_call.1} parent=1 // pred_region
      %62 = dma.done [#allocation4], 128
    $region25: #{tpu_custom_call.1} parent=1 // pred_fallthru
      _
    %63 = vsyncpa [#allocation3], 1
    %64 = vsyncpa [#allocation4], 1

</llo_original>
